<compile_context>
chip_gen: v7x
topology: tpu7x:2x2x1
jax: 0.10.0
libtpu: 0.0.40
codegen_flags: <defaults>
</compile_context>

<pallas_src>
import functools

import jax
import jax.numpy as jnp
from jax.experimental import pallas as pl
from jax.experimental.pallas import tpu as pltpu

EPS = 1e-5                      # PyTorch BatchNorm default eps
_INV_SQRT2 = 0.7071067811865476


def _gelu(x):
    # exact GELU (PyTorch nn.GELU(), approximate='none')
    return 0.5 * x * (1.0 + jax.lax.erf(x * _INV_SQRT2))


def _round_up(x, m):
    return (x + m - 1) // m * m


def _pick_tile(n, candidates=(512, 256, 128)):
    # n is always a multiple of 128 where this is used.
    for c in candidates:
        if n % c == 0:
            return c
    return n


_VMEM_LIMIT = None


def _vmem_limit_bytes():
    """~96 MiB on 128-MiB-VMEM chips (v5e/v6e), ~48 MiB on v7x (64 MiB VMEM)."""
    global _VMEM_LIMIT
    if _VMEM_LIMIT is None:
        cap = 128 * 1024 * 1024
        try:
            cap = int(getattr(pltpu.get_tpu_info(), "vmem_capacity_bytes", cap))
        except Exception:
            pass
        _VMEM_LIMIT = int(min(96 * 1024 * 1024,
                              max(32 * 1024 * 1024, (cap * 3) // 4)))
    return _VMEM_LIMIT


def _row_chunk(H, W, pad):
    """Rows per chunk: divides H, >= pad, targets ~512 matmul rows per chunk."""
    target = max(pad, 1, 512 // max(W, 1))
    divs = [d for d in range(1, H + 1) if H % d == 0 and d >= pad]
    fits = [d for d in divs if d <= target]
    if fits:
        return max(fits)
    return min(divs) if divs else H


# ----------------------------------------------------------------------------
# Kernel 1: tiled matmul + bias + GELU + folded-BN  (patch embedding)
# ----------------------------------------------------------------------------
def matmul_gelu_bn_kernel(x_ref, w_ref, b_ref, s_ref, t_ref, o_ref, acc_ref):
    @pl.when(pl.program_id(2) == 0)
    def _():
        acc_ref[...] = jnp.zeros_like(acc_ref)

    acc_ref[...] += jnp.dot(x_ref[...], w_ref[...],
                            preferred_element_type=jnp.float32)

    @pl.when(pl.program_id(2) == pl.num_programs(2) - 1)
    def _():
        y = _gelu(acc_ref[...] + b_ref[...])
        o_ref[...] = (y * s_ref[...] + t_ref[...]).astype(o_ref.dtype)


def matmul_gelu_bn(x, w_bf16, b, scale, shift):
    """x: (N, K) f32; w: (Kp, Dp) bf16 zero-padded. Returns (N, Dp) bf16."""
    N, K = x.shape
    Kp, Dp = w_bf16.shape

    # M-tile selection: pad rows up to the tile instead of collapsing the grid.
    Np = _round_up(N, 8)
    if Np <= 512:
        TM = Np
    else:
        TM = 512
        Np = _round_up(Np, TM)
    TK = _pick_tile(Kp)
    TN = _pick_tile(Dp)

    # pre-cast the A operand to bf16 in the wrapper (halves re-read traffic).
    x = jnp.pad(x, ((0, Np - N), (0, Kp - K))).astype(jnp.bfloat16)

    grid = (Np // TM, Dp // TN, Kp // TK)
    out = pl.pallas_call(
        matmul_gelu_bn_kernel,
        grid_spec=pltpu.PrefetchScalarGridSpec(
            num_scalar_prefetch=0,
            grid=grid,
            in_specs=[
                pl.BlockSpec((TM, TK), lambda i, j, k: (i, k)),
                pl.BlockSpec((TK, TN), lambda i, j, k: (k, j)),
                pl.BlockSpec((1, TN), lambda i, j, k: (0, j)),
                pl.BlockSpec((1, TN), lambda i, j, k: (0, j)),
                pl.BlockSpec((1, TN), lambda i, j, k: (0, j)),
            ],
            out_specs=pl.BlockSpec((TM, TN), lambda i, j, k: (i, j)),
            scratch_shapes=[pltpu.VMEM((TM, TN), jnp.float32)],
        ),
        out_shape=jax.ShapeDtypeStruct((Np, Dp), jnp.bfloat16),
        compiler_params=pltpu.CompilerParams(
            dimension_semantics=("parallel", "parallel", "arbitrary"),
            vmem_limit_bytes=_vmem_limit_bytes()),
    )(x, w_bf16, b[None, :], scale[None, :], shift[None, :])
    return out[:N]


# ----------------------------------------------------------------------------
# Kernel 2: fused ConvMixer block, grid = (batch, row-chunk)
#   depthwise KxK + GELU + BN + residual  ->  1x1 pointwise + GELU + BN
# ----------------------------------------------------------------------------
def mixer_block_kernel(x_ref, dww_ref, dwb_ref, dws_ref, dwt_ref,
                       pww_ref, pwb_ref, pws_ref, pwt_ref,
                       o_ref, strip_ref, *, ksize, pad, ch):
    _, H, W, Dp = x_ref.shape
    c = pl.program_id(1)
    nc = pl.num_programs(1)
    r0 = pl.multiple_of(c * ch, ch)          # first output row of this chunk

    # ---- build the halo strip for this chunk: zero only the border (tiny), ----
    # ---- write the interior exactly once (was: full zero + full copy).      ----
    if pad:
        zcol = jnp.zeros((ch + 2 * pad, pad, Dp), strip_ref.dtype)
        strip_ref[:, :pad, :] = zcol
        strip_ref[:, pad + W:, :] = zcol
    strip_ref[pad:pad + ch, pad:pad + W, :] = x_ref[0, pl.ds(r0, ch), :, :]
    if pad:
        zrow = jnp.zeros((pad, W, Dp), strip_ref.dtype)

        @pl.when(c == 0)
        def _():
            strip_ref[:pad, pad:pad + W, :] = zrow

        @pl.when(c > 0)
        def _():
            strip_ref[:pad, pad:pad + W, :] = x_ref[0, pl.ds(r0 - pad, pad), :, :]

        @pl.when(c == nc - 1)
        def _():
            strip_ref[pad + ch:, pad:pad + W, :] = zrow

        @pl.when(c < nc - 1)
        def _():
            strip_ref[pad + ch:, pad:pad + W, :] = x_ref[0, pl.ds(r0 + ch, pad), :, :]

    # ---- depthwise KxK conv: one strip load per kernel row, f32 accumulation ----
    acc = jnp.zeros((ch, W, Dp), jnp.float32)
    for kh in range(ksize):
        row = strip_ref[kh:kh + ch, :, :].astype(jnp.float32)    # (ch, W+2p, Dp)
        for kw in range(ksize):
            acc = acc + row[:, kw:kw + W, :] * dww_ref[kh * ksize + kw, :]

    y = _gelu(acc + dwb_ref[0])
    y = y * dws_ref[0] + dwt_ref[0]                               # folded BN
    y = y + x_ref[0, pl.ds(r0, ch), :, :].astype(jnp.float32)     # residual

    # ---- 1x1 pointwise conv (bf16 MXU), GELU, folded BN ----
    z = jnp.dot(y.reshape(ch * W, Dp).astype(jnp.bfloat16), pww_ref[...],
                preferred_element_type=jnp.float32)
    z = _gelu(z + pwb_ref[...])
    z = z * pws_ref[...] + pwt_ref[...]
    o_ref[...] = z.reshape(1, ch, W, Dp).astype(o_ref.dtype)


def mixer_block(x, blk, ksize):
    B, H, W, Dp = x.shape
    pad = ksize // 2
    ch = _row_chunk(H, W, pad)
    nc = H // ch
    dw, pw = blk['dw'], blk['pw']
    vec = lambda v: v[None, :]
    const2 = lambda b, c: (0, 0)
    kern = functools.partial(mixer_block_kernel, ksize=ksize, pad=pad, ch=ch)
    return pl.pallas_call(
        kern,
        grid_spec=pltpu.PrefetchScalarGridSpec(
            num_scalar_prefetch=0,
            grid=(B, nc),
            in_specs=[
                pl.BlockSpec((1, H, W, Dp), lambda b, c: (b, 0, 0, 0)),
                pl.BlockSpec((ksize * ksize, Dp), const2),
                pl.BlockSpec((1, Dp), const2),
                pl.BlockSpec((1, Dp), const2),
                pl.BlockSpec((1, Dp), const2),
                pl.BlockSpec((Dp, Dp), const2),
                pl.BlockSpec((1, Dp), const2),
                pl.BlockSpec((1, Dp), const2),
                pl.BlockSpec((1, Dp), const2),
            ],
            out_specs=pl.BlockSpec((1, ch, W, Dp), lambda b, c: (b, c, 0, 0)),
            scratch_shapes=[
                pltpu.VMEM((ch + 2 * pad, W + 2 * pad, Dp), x.dtype)],
        ),
        out_shape=jax.ShapeDtypeStruct((B, H, W, Dp), x.dtype),
        compiler_params=pltpu.CompilerParams(
            dimension_semantics=("parallel", "parallel"),
            vmem_limit_bytes=_vmem_limit_bytes()),
    )(x, dw['w'], vec(dw['b']), vec(dw['scale']), vec(dw['shift']),
      pw['w'], vec(pw['b']), vec(pw['scale']), vec(pw['shift']))


# ----------------------------------------------------------------------------
# Kernel 3: global average pool + classifier head (grid over batch, MXU matvec)
# ----------------------------------------------------------------------------
def pool_head_kernel(x_ref, w_ref, b_ref, o_ref):
    pooled = jnp.mean(x_ref[0].astype(jnp.float32), axis=0)        # (Dp,)
    logits = jnp.dot(pooled.reshape(1, -1).astype(jnp.bfloat16), w_ref[...],
                     preferred_element_type=jnp.float32)            # (1, Cp)
    o_ref[0] = logits + b_ref[...]


def pool_head(xseq, w_bf16, b):
    B, S, Dp = xseq.shape
    Cp = w_bf16.shape[1]
    out = pl.pallas_call(
        pool_head_kernel,
        grid_spec=pltpu.PrefetchScalarGridSpec(
            num_scalar_prefetch=0,
            grid=(B,),
            in_specs=[
                pl.BlockSpec((1, S, Dp), lambda b_: (b_, 0, 0)),
                pl.BlockSpec((Dp, Cp), lambda b_: (0, 0)),
                pl.BlockSpec((1, Cp), lambda b_: (0, 0)),
            ],
            out_specs=pl.BlockSpec((1, 1, Cp), lambda b_: (b_, 0, 0)),
        ),
        out_shape=jax.ShapeDtypeStruct((B, 1, Cp), jnp.float32),
        compiler_params=pltpu.CompilerParams(
            dimension_semantics=("parallel",),
            vmem_limit_bytes=_vmem_limit_bytes()),
    )(xseq, w_bf16, b[None, :])
    return out[:, 0, :]


# ----------------------------------------------------------------------------
# Parameter init (deterministic, synthetic) with folded BN + channel padding
# ----------------------------------------------------------------------------
def _bn_fold(key, c):
    # BatchNorm2d inference mode: fold (gamma, beta, mean, var) -> (scale, shift).
    k1, k2, k3, k4 = jax.random.split(key, 4)
    gamma = 1.0 + 0.1 * jax.random.normal(k1, (c,), jnp.float32)
    beta = 0.1 * jax.random.normal(k2, (c,), jnp.float32)
    mean = 0.1 * jax.random.normal(k3, (c,), jnp.float32)
    var = 1.0 + 0.1 * jnp.abs(jax.random.normal(k4, (c,), jnp.float32))
    scale = gamma * jax.lax.rsqrt(var + EPS)
    shift = beta - mean * scale
    return scale, shift


def _pad_last(a, size):
    extra = size - a.shape[-1]
    if extra == 0:
        return a
    widths = [(0, 0)] * (a.ndim - 1) + [(0, extra)]
    return jnp.pad(a, widths)


def _pad_2d(a, rows, cols):
    return jnp.pad(a, ((0, rows - a.shape[0]), (0, cols - a.shape[1])))


def init_params(key, input_channels, dim, kernel_size, patch_size, depth, num_classes):
    Dp = _round_up(dim, 128)
    Cp = _round_up(num_classes, 128)
    Kpe = input_channels * patch_size * patch_size
    Kpe_p = _round_up(Kpe, 128)

    keys = jax.random.split(key, 2 + 2 * depth + 1)
    params = dict(dim=dim, dim_padded=Dp, kernel_size=kernel_size,
                  patch_size=patch_size, num_classes=num_classes,
                  num_classes_padded=Cp)

    # patch embedding: Conv2d(Cin, dim, k=patch, stride=patch) + GELU + BN
    kpe, kbn = jax.random.split(keys[0])
    w_pe = 0.1 * jax.random.normal(
        kpe, (dim, input_channels, patch_size, patch_size), jnp.float32)
    w_pe = w_pe.reshape(dim, Kpe).T                      # (Kpe, dim), flat (c, kh, kw)
    s_pe, t_pe = _bn_fold(kbn, dim)
    params['patch_embed'] = dict(
        w=_pad_2d(w_pe, Kpe_p, Dp).astype(jnp.bfloat16),
        b=_pad_last(0.01 * jnp.arange(dim, dtype=jnp.float32), Dp),
        scale=_pad_last(s_pe, Dp),
        shift=_pad_last(t_pe, Dp),
    )

    # ConvMixer blocks
    blocks = []
    for d in range(depth):
        kdw, kdb = jax.random.split(keys[1 + 2 * d])
        kpw, kpb = jax.random.split(keys[2 + 2 * d])
        w_dw = 0.1 * jax.random.normal(
            kdw, (dim, 1, kernel_size, kernel_size), jnp.float32)
        w_dw = jnp.transpose(w_dw[:, 0, :, :], (1, 2, 0)).reshape(
            kernel_size * kernel_size, dim)              # taps indexed kh*k + kw
        s_dw, t_dw = _bn_fold(kdb, dim)
        dw = dict(
            w=_pad_last(w_dw, Dp),
            b=_pad_last(0.01 * jnp.arange(dim, dtype=jnp.float32), Dp),
            scale=_pad_last(s_dw, Dp),
            shift=_pad_last(t_dw, Dp),
        )
        w_pw = 0.1 * jax.random.normal(kpw, (dim, dim, 1, 1), jnp.float32)
        w_pw = w_pw.reshape(dim, dim).T                  # (Cin, Cout)
        s_pw, t_pw = _bn_fold(kpb, dim)
        pw = dict(
            w=_pad_2d(w_pw, Dp, Dp).astype(jnp.bfloat16),
            b=_pad_last(-0.01 * jnp.arange(dim, dtype=jnp.float32), Dp),
            scale=_pad_last(s_pw, Dp),
            shift=_pad_last(t_pw, Dp),
        )
        blocks.append(dict(dw=dw, pw=pw))
    params['blocks'] = blocks

    # classifier head
    kh_ = keys[-1]
    w_h = 0.1 * jax.random.normal(kh_, (num_classes, dim), jnp.float32).T  # (dim, ncls)
    params['head'] = dict(
        w=_pad_2d(w_h, Dp, Cp).astype(jnp.bfloat16),
        b=_pad_last(0.01 * jnp.arange(num_classes, dtype=jnp.float32), Cp),
    )
    return params


# ----------------------------------------------------------------------------
# Forward pass (glue in plain JAX, hot paths in Pallas kernels)
# ----------------------------------------------------------------------------
def conv_mixer_forward(x_nchw, params):
    B, Cin, H, W = x_nchw.shape
    p = params['patch_size']
    k = params['kernel_size']
    Dp = params['dim_padded']
    ncls = params['num_classes']
    Hp, Wp = H // p, W // p
    N = B * Hp * Wp

    # ---- patch embedding: non-overlapping conv == matmul over flat patches ----
    patches = (x_nchw.reshape(B, Cin, Hp, p, Wp, p)
               .transpose(0, 2, 4, 1, 3, 5)
               .reshape(N, Cin * p * p))                  # flat order (c, kh, kw)
    pe = params['patch_embed']
    y = matmul_gelu_bn(patches, pe['w'], pe['b'], pe['scale'], pe['shift'])
    x = y.reshape(B, Hp, Wp, Dp)                          # NHWC, channel-padded, bf16

    # ---- fused ConvMixer blocks ----
    for blk in params['blocks']:
        x = mixer_block(x, blk, k)

    # ---- global average pool + classifier ----
    head = params['head']
    logits = pool_head(x.reshape(B, Hp * Wp, Dp), head['w'], head['b'])
    return logits[:, :ncls]


if __name__ == "__main__":
    key = jax.random.PRNGKey(0)
    pkey, xkey = jax.random.split(key)

    # small but representative config (dim padded to 128 lanes internally)
    B, Cin, H, W = 2, 3, 16, 16
    dim, ksize, patch, depth, num_classes = 32, 3, 2, 2, 10

    params = init_params(pkey, Cin, dim, ksize, patch, depth, num_classes)
    x = jax.random.normal(xkey, (B, Cin, H, W), jnp.float32)   # NCHW like PyTorch

    out = conv_mixer_forward(x, params)
    out = jax.block_until_ready(out)
    assert out.shape == (B, num_classes)
    assert bool(jnp.all(jnp.isfinite(out)))
    print("KERNEL_OK")
</pallas_src>

<mosaic_0001>
module attributes {stable_mosaic.version = 11 : i64} {
  func.func @matmul_gelu_bn_kernel(%arg0: i32, %arg1: i32, %arg2: i32, %arg3: memref<128x128xbf16, #tpu.memory_space<vmem>>, %arg4: memref<128x128xbf16, #tpu.memory_space<vmem>>, %arg5: memref<1x128xf32, #tpu.memory_space<vmem>>, %arg6: memref<1x128xf32, #tpu.memory_space<vmem>>, %arg7: memref<1x128xf32, #tpu.memory_space<vmem>>, %arg8: memref<128x128xbf16, #tpu.memory_space<vmem>>, %arg9: memref<128x128xf32, #tpu.memory_space<vmem>>) attributes {dimension_semantics = [#tpu.dimension_semantics<parallel>, #tpu.dimension_semantics<parallel>, #tpu.dimension_semantics<arbitrary>], iteration_bounds = array<i64: 1, 1, 1>, scalar_prefetch = 0 : i64, scratch_operands = 1 : i64, tpu.core_type = #tpu.core_type<tc>, window_params = [{transform_indices = @transform_0, window_bounds = array<i64: 128, 128>}, {transform_indices = @transform_1, window_bounds = array<i64: 128, 128>}, {transform_indices = @transform_2, window_bounds = array<i64: 1, 128>}, {transform_indices = @transform_3, window_bounds = array<i64: 1, 128>}, {transform_indices = @transform_4, window_bounds = array<i64: 1, 128>}, {transform_indices = @transform_5, window_bounds = array<i64: 128, 128>}]} {
    %c0_i32 = arith.constant 0 : i32
    %0 = arith.cmpi eq, %arg2, %c0_i32 : i32
    %1 = arith.extui %0 : i1 to i32
    %c0_i32_0 = arith.constant 0 : i32
    %2 = arith.cmpi ne, %1, %c0_i32_0 : i32
    scf.if %2 {
      %cst_10 = arith.constant 0.000000e+00 : f32
      %12 = vector.broadcast %cst_10 : f32 to vector<128x128xf32>
      %c0_11 = arith.constant 0 : index
      %c0_12 = arith.constant 0 : index
      %13 = vector.load %arg9[%c0_11, %c0_12] : memref<128x128xf32, #tpu.memory_space<vmem>>, vector<128x128xf32>
      tpu.vector_store %arg9[%c0_11, %c0_12], %12 {strides = array<i32>} : memref<128x128xf32, #tpu.memory_space<vmem>>, vector<128x128xf32>,
    } else {
    }
    %c0 = arith.constant 0 : index
    %c0_1 = arith.constant 0 : index
    %3 = vector.load %arg9[%c0, %c0_1] : memref<128x128xf32, #tpu.memory_space<vmem>>, vector<128x128xf32>
    %c0_2 = arith.constant 0 : index
    %c0_3 = arith.constant 0 : index
    %4 = vector.load %arg3[%c0_2, %c0_3] : memref<128x128xbf16, #tpu.memory_space<vmem>>, vector<128x128xbf16>
    %c0_4 = arith.constant 0 : index
    %c0_5 = arith.constant 0 : index
    %5 = vector.load %arg4[%c0_4, %c0_5] : memref<128x128xbf16, #tpu.memory_space<vmem>>, vector<128x128xbf16>
    %cst = arith.constant dense<0.000000e+00> : vector<128x128xf32>
    %6 = tpu.matmul %4, %5, %cst {dimension_numbers = #tpu.dot_dimension_numbers<[1], [0], [0], [1], [0, 0, 1, 1], [], []>} : vector<128x128xbf16>, vector<128x128xbf16>, vector<128x128xf32> -> vector<128x128xf32>
    %7 = arith.addf %3, %6 : vector<128x128xf32>
    %c0_6 = arith.constant 0 : index
    %c0_7 = arith.constant 0 : index
    %8 = vector.load %arg9[%c0_6, %c0_7] : memref<128x128xf32, #tpu.memory_space<vmem>>, vector<128x128xf32>
    tpu.vector_store %arg9[%c0_6, %c0_7], %7 {strides = array<i32>} : memref<128x128xf32, #tpu.memory_space<vmem>>, vector<128x128xf32>,
    %c0_i32_8 = arith.constant 0 : i32
    %9 = arith.cmpi eq, %arg2, %c0_i32_8 : i32
    %10 = arith.extui %9 : i1 to i32
    %c0_i32_9 = arith.constant 0 : i32
    %11 = arith.cmpi ne, %10, %c0_i32_9 : i32
    scf.if %11 {
      %c0_10 = arith.constant 0 : index
      %c0_11 = arith.constant 0 : index
      %12 = vector.load %arg9[%c0_10, %c0_11] : memref<128x128xf32, #tpu.memory_space<vmem>>, vector<128x128xf32>
      %c0_12 = arith.constant 0 : index
      %c0_13 = arith.constant 0 : index
      %13 = vector.load %arg5[%c0_12, %c0_13] : memref<1x128xf32, #tpu.memory_space<vmem>>, vector<1x128xf32>
      %14 = vector.broadcast %13 : vector<1x128xf32> to vector<128x128xf32>
      %15 = arith.addf %12, %14 : vector<128x128xf32>
      %cst_14 = arith.constant 5.000000e-01 : f32
      %16 = vector.broadcast %cst_14 : f32 to vector<128x128xf32>
      %17 = arith.mulf %16, %15 : vector<128x128xf32>
      %cst_15 = arith.constant 0.707106769 : f32
      %18 = vector.broadcast %cst_15 : f32 to vector<128x128xf32>
      %19 = arith.mulf %15, %18 : vector<128x128xf32>
      %20 = math.erf %19 : vector<128x128xf32>
      %cst_16 = arith.constant 1.000000e+00 : f32
      %21 = vector.broadcast %cst_16 : f32 to vector<128x128xf32>
      %22 = arith.addf %21, %20 : vector<128x128xf32>
      %23 = arith.mulf %17, %22 : vector<128x128xf32>
      %c0_17 = arith.constant 0 : index
      %c0_18 = arith.constant 0 : index
      %24 = vector.load %arg6[%c0_17, %c0_18] : memref<1x128xf32, #tpu.memory_space<vmem>>, vector<1x128xf32>
      %25 = vector.broadcast %24 : vector<1x128xf32> to vector<128x128xf32>
      %26 = arith.mulf %23, %25 : vector<128x128xf32>
      %c0_19 = arith.constant 0 : index
      %c0_20 = arith.constant 0 : index
      %27 = vector.load %arg7[%c0_19, %c0_20] : memref<1x128xf32, #tpu.memory_space<vmem>>, vector<1x128xf32>
      %28 = vector.broadcast %27 : vector<1x128xf32> to vector<128x128xf32>
      %29 = arith.addf %26, %28 : vector<128x128xf32>
      %30 = arith.truncf %29 : vector<128x128xf32> to vector<128x128xbf16>
      %c0_21 = arith.constant 0 : index
      %c0_22 = arith.constant 0 : index
      %31 = vector.load %arg8[%c0_21, %c0_22] : memref<128x128xbf16, #tpu.memory_space<vmem>>, vector<128x128xbf16>
      tpu.vector_store %arg8[%c0_21, %c0_22], %30 {strides = array<i32>} : memref<128x128xbf16, #tpu.memory_space<vmem>>, vector<128x128xbf16>,
    } else {
    }
    return
  }
  func.func @transform_0(%arg0: i32, %arg1: i32, %arg2: i32) -> (i32, i32) {
    %c0_i32 = arith.constant 0 : i32
    return %arg0, %arg2 : i32, i32
  }
  func.func @transform_1(%arg0: i32, %arg1: i32, %arg2: i32) -> (i32, i32) {
    %c0_i32 = arith.constant 0 : i32
    return %arg2, %arg1 : i32, i32
  }
  func.func @transform_2(%arg0: i32, %arg1: i32, %arg2: i32) -> (i32, i32) {
    %c0_i32 = arith.constant 0 : i32
    %c0_i32_0 = arith.constant 0 : i32
    return %c0_i32, %arg1 : i32, i32
  }
  func.func @transform_3(%arg0: i32, %arg1: i32, %arg2: i32) -> (i32, i32) {
    %c0_i32 = arith.constant 0 : i32
    %c0_i32_0 = arith.constant 0 : i32
    return %c0_i32, %arg1 : i32, i32
  }
  func.func @transform_4(%arg0: i32, %arg1: i32, %arg2: i32) -> (i32, i32) {
    %c0_i32 = arith.constant 0 : i32
    %c0_i32_0 = arith.constant 0 : i32
    return %c0_i32, %arg1 : i32, i32
  }
  func.func @transform_5(%arg0: i32, %arg1: i32, %arg2: i32) -> (i32, i32) {
    %c0_i32 = arith.constant 0 : i32
    return %arg0, %arg1 : i32, i32
  }
}

</mosaic_0001>

<llo_original>
// kernel: tpu_custom_call.1
$region0: #{tpu_custom_call.1}
  #allocation0 [shape = 'u32[]', space=smem, size = 0x4, offset = 0x4, fixed_abs, tag = 'smem constant byte address 0x4 - core index']
  #allocation1 [shape = 'u32[144,128]{1,0:T(1,128)}', space=vmem, size = 0x12000, scoped, tag = 'internal scratch']
  #allocation2 [shape = 'f32[128,128]{1,0:T(8,128)}', space=vmem, size = 0x10000, scoped, tag = 'scratch operand']
  %s0 = inlined_call_operand.hbm [shape: bf16[128,128], index: 0, kind: input, shape index: {}]
  %s1 = inlined_call_operand.hbm [shape: bf16[128,128], index: 1, kind: input, shape index: {}]
  %s2 = inlined_call_operand.hbm [shape: f32[1,128], index: 2, kind: input, shape index: {}]
  %s3 = inlined_call_operand.hbm [shape: f32[1,128], index: 3, kind: input, shape index: {}]
  %s4 = inlined_call_operand.hbm [shape: f32[1,128], index: 4, kind: input, shape index: {}]
  %s5 = inlined_call_operand.hbm [shape: bf16[128,128], index: 5, kind: output, shape index: {}]
  %s6 = sld [smem:[#allocation0]]
  $region58: #{tpu_custom_call.1} parent=0
    _
  %s8 = ssub.s32 1, %s6
  %s9 = scalar_select 0, %s8, %s6
  $region1: #{tpu_custom_call.1} parent=0
    #allocation3 [shape = 'u8[32768]{0}', space=vmem, size = 0x8000, scoped, tag = 'input window, operand 0, single buffered']
    #allocation4 [shape = 's32[1]{0}', space=sflag, size = 0x4, scoped, tag = 'scoped memory for tpu_custom_call.1']
    #allocation5 [shape = 's32[1]{0}', space=sflag, size = 0x4, scoped, tag = 'scoped memory for tpu_custom_call.1']
    #allocation6 [shape = 'u8[32768]{0}', space=vmem, size = 0x8000, scoped, tag = 'input window, operand 1, single buffered']
    #allocation7 [shape = 's32[1]{0}', space=sflag, size = 0x4, scoped, tag = 'scoped memory for tpu_custom_call.1']
    #allocation8 [shape = 'u8[512]{0}', space=vmem, size = 0x400, scoped, tag = 'input window, operand 2, single buffered']
    #allocation9 [shape = 'u8[512]{0}', space=vmem, size = 0x400, scoped, tag = 'input window, operand 3, single buffered']
    #allocation10 [shape = 's32[1]{0}', space=sflag, size = 0x4, scoped, tag = 'scoped memory for tpu_custom_call.1']
    #allocation11 [shape = 'u8[512]{0}', space=vmem, size = 0x400, scoped, tag = 'input window, operand 4, single buffered']
    #allocation12 [shape = 'u8[32768]{0}', space=vmem, size = 0x8000, scoped, tag = 'output window, operand 0, single buffered']
    %10 = vsyncpa [#allocation4], 0
    %11 = vsyncpa [#allocation7], 0
    %12 = vsyncpa [#allocation10], 0
    %13 = vsyncpa [#allocation5], 0
    // Predicated region
    $region2: #{tpu_custom_call.1} parent=1 // pred_check
      _
    $region3: #{tpu_custom_call.1} parent=1 // pred_check_branch
      %15 = sbr.rel (0) target = $region5
    $region4: #{tpu_custom_call.1} parent=1 // pred_region
      %s17 = ssub.s32 1024, 1024
      %18 = vsyncadd [#allocation4], %s17
      %s19 = sshll.u32 [#allocation3], 4
      %s20 = int_to_ptr.vmem [resolvable:$true] %s19
      %25 = dma.hbm_to_vmem [thread:$0]  %s0, 1024, %s20, [#allocation4], 64, 64, 4
    $region5: #{tpu_custom_call.1} parent=1 // pred_fallthru
      _
    // Predicated region
    $region6: #{tpu_custom_call.1} parent=1 // pred_check
      _
    $region7: #{tpu_custom_call.1} parent=1 // pred_check_branch
      %27 = sbr.rel (0) target = $region9
    $region8: #{tpu_custom_call.1} parent=1 // pred_region
      %s29 = ssub.s32 1024, 1024
      %30 = vsyncadd [#allocation7], %s29
      %s31 = sshll.u32 [#allocation6], 4
      %s32 = int_to_ptr.vmem [resolvable:$true] %s31
      %37 = dma.hbm_to_vmem [thread:$0]  %s1, 1024, %s32, [#allocation7], 64, 64, 4
    $region9: #{tpu_custom_call.1} parent=1 // pred_fallthru
      _
    // Predicated region
    $region10: #{tpu_custom_call.1} parent=1 // pred_check
      _
    $region11: #{tpu_custom_call.1} parent=1 // pred_check_branch
      %39 = sbr.rel (0) target = $region13
    $region12: #{tpu_custom_call.1} parent=1 // pred_region
      %s41 = ssub.s32 16, 16
      %42 = vsyncadd [#allocation7], %s41
      %s44 = sshll.u32 [#allocation8], 4
      %s45 = int_to_ptr.vmem [resolvable:$true] %s44
      %47 = dma.hbm_to_vmem [thread:$0]  %s2, 16, %s45, [#allocation7]
    $region13: #{tpu_custom_call.1} parent=1 // pred_fallthru
      _
    // Predicated region
    $region14: #{tpu_custom_call.1} parent=1 // pred_check
      _
    $region15: #{tpu_custom_call.1} parent=1 // pred_check_branch
      %49 = sbr.rel (0) target = $region17
    $region16: #{tpu_custom_call.1} parent=1 // pred_region
      %s51 = ssub.s32 16, 16
      %52 = vsyncadd [#allocation10], %s51
      %s54 = sshll.u32 [#allocation9], 4
      %s55 = int_to_ptr.vmem [resolvable:$true] %s54
      %57 = dma.hbm_to_vmem [thread:$0]  %s3, 16, %s55, [#allocation10]
    $region17: #{tpu_custom_call.1} parent=1 // pred_fallthru
      _
    // Predicated region
    $region18: #{tpu_custom_call.1} parent=1 // pred_check
      _
    $region19: #{tpu_custom_call.1} parent=1 // pred_check_branch
      %59 = sbr.rel (0) target = $region21
    $region20: #{tpu_custom_call.1} parent=1 // pred_region
      %s61 = ssub.s32 16, 16
      %62 = vsyncadd [#allocation10], %s61
      %s64 = sshll.u32 [#allocation11], 4
      %s65 = int_to_ptr.vmem [resolvable:$true] %s64
      %67 = dma.hbm_to_vmem [thread:$0]  %s4, 16, %s65, [#allocation10]
    $region21: #{tpu_custom_call.1} parent=1 // pred_fallthru
      _
    // Predicated region
    $region22: #{tpu_custom_call.1} parent=1 // pred_check
      _
    $region23: #{tpu_custom_call.1} parent=1 // pred_check_branch
      %69 = sbr.rel (0) target = $region25
    $region24: #{tpu_custom_call.1} parent=1 // pred_region
      %70 = dma.done [#allocation4], 1024
    $region25: #{tpu_custom_call.1} parent=1 // pred_fallthru
      _
    // Predicated region
    $region26: #{tpu_custom_call.1} parent=1 // pred_check
      _
    $region27: #{tpu_custom_call.1} parent=1 // pred_check_branch
      %72 = sbr.rel (0) target = $region29
    $region28: #{tpu_custom_call.1} parent=1 // pred_region
      %73 = dma.done [#allocation7], 1024
    $region29: #{tpu_custom_call.1} parent=1 // pred_fallthru
      _
    // Predicated region
    $region30: #{tpu_custom_call.1} parent=1 // pred_check
      _
    $region31: #{tpu_custom_call.1} parent=1 // pred_check_branch
      %75 = sbr.rel (0) target = $region33
    $region32: #{tpu_custom_call.1} parent=1 // pred_region
      %76 = dma.done [#allocation7], 16
    $region33: #{tpu_custom_call.1} parent=1 // pred_fallthru
      _
    // Predicated region
    $region34: #{tpu_custom_call.1} parent=1 // pred_check
      _
    $region35: #{tpu_custom_call.1} parent=1 // pred_check_branch
      %78 = sbr.rel (0) target = $region37
    $region36: #{tpu_custom_call.1} parent=1 // pred_region
      %79 = dma.done [#allocation10], 16
    $region37: #{tpu_custom_call.1} parent=1 // pred_fallthru
      _
    // Predicated region
    $region38: #{tpu_custom_call.1} parent=1 // pred_check
      _
    $region39: #{tpu_custom_call.1} parent=1 // pred_check_branch
      %81 = sbr.rel (0) target = $region41
    $region40: #{tpu_custom_call.1} parent=1 // pred_region
      %82 = dma.done [#allocation10], 16
    $region41: #{tpu_custom_call.1} parent=1 // pred_fallthru
      _
    %p84 = scmp.eq.s32.totalorder 0, 0
    // Predicated region
    $region42: #{tpu_custom_call.1} parent=1 // pred_check
      %p85 = pneg %p84
    $region43: #{tpu_custom_call.1} parent=1 // pred_check_branch
      %87 = sbr.rel (%p85) target = $region45
    $region44: #{tpu_custom_call.1} parent=1 // pred_region
      %88 = vst [vmem:[#allocation2] sm:$0xff] 0.0
      %89 = vst [vmem:[#allocation2 + $0x8] sm:$0xff] 0.0
      %90 = vst [vmem:[#allocation2 + $0x10] sm:$0xff] 0.0
      %91 = vst [vmem:[#allocation2 + $0x18] sm:$0xff] 0.0
      %92 = vst [vmem:[#allocation2 + $0x20] sm:$0xff] 0.0
      %93 = vst [vmem:[#allocation2 + $0x28] sm:$0xff] 0.0
      %94 = vst [vmem:[#allocation2 + $0x30] sm:$0xff] 0.0
      %95 = vst [vmem:[#allocation2 + $0x38] sm:$0xff] 0.0
      %96 = vst [vmem:[#allocation2 + $0x40] sm:$0xff] 0.0
      %97 = vst [vmem:[#allocation2 + $0x48] sm:$0xff] 0.0
      %98 = vst [vmem:[#allocation2 + $0x50] sm:$0xff] 0.0
      %99 = vst [vmem:[#allocation2 + $0x58] sm:$0xff] 0.0
      %100 = vst [vmem:[#allocation2 + $0x60] sm:$0xff] 0.0
      %101 = vst [vmem:[#allocation2 + $0x68] sm:$0xff] 0.0
      %102 = vst [vmem:[#allocation2 + $0x70] sm:$0xff] 0.0
      %103 = vst [vmem:[#allocation2 + $0x78] sm:$0xff] 0.0
    $region45: #{tpu_custom_call.1} parent=1 // pred_fallthru
      _
    %v104 = vld [vmem:[#allocation2] sm:$0xff]
    %v105 = vld [vmem:[#allocation2 + $0x8] sm:$0xff]
    %v106 = vld [vmem:[#allocation2 + $0x10] sm:$0xff]
    %v107 = vld [vmem:[#allocation2 + $0x18] sm:$0xff]
    %v108 = vld [vmem:[#allocation2 + $0x20] sm:$0xff]
    %v109 = vld [vmem:[#allocation2 + $0x28] sm:$0xff]
    %v110 = vld [vmem:[#allocation2 + $0x30] sm:$0xff]
    %v111 = vld [vmem:[#allocation2 + $0x38] sm:$0xff]
    %v112 = vld [vmem:[#allocation2 + $0x40] sm:$0xff]
    %v113 = vld [vmem:[#allocation2 + $0x48] sm:$0xff]
    %v114 = vld [vmem:[#allocation2 + $0x50] sm:$0xff]
    %v115 = vld [vmem:[#allocation2 + $0x58] sm:$0xff]
    %v116 = vld [vmem:[#allocation2 + $0x60] sm:$0xff]
    %v117 = vld [vmem:[#allocation2 + $0x68] sm:$0xff]
    %v118 = vld [vmem:[#allocation2 + $0x70] sm:$0xff]
    %v119 = vld [vmem:[#allocation2 + $0x78] sm:$0xff]
    %v120 = vld [vmem:[#allocation3] sm:$0xf]
    %v121 = vld [vmem:[#allocation3 + $0x4] sm:$0xf]
    %v122 = vld [vmem:[#allocation3 + $0x8] sm:$0xf]
    %v123 = vld [vmem:[#allocation3 + $0xc] sm:$0xf]
    %v124 = vld [vmem:[#allocation3 + $0x10] sm:$0xf]
    %v125 = vld [vmem:[#allocation3 + $0x14] sm:$0xf]
    %v126 = vld [vmem:[#allocation3 + $0x18] sm:$0xf]
    %v127 = vld [vmem:[#allocation3 + $0x1c] sm:$0xf]
    %v128 = vld [vmem:[#allocation3 + $0x20] sm:$0xf]
    %v129 = vld [vmem:[#allocation3 + $0x24] sm:$0xf]
    %v130 = vld [vmem:[#allocation3 + $0x28] sm:$0xf]
    %v131 = vld [vmem:[#allocation3 + $0x2c] sm:$0xf]
    %v132 = vld [vmem:[#allocation3 + $0x30] sm:$0xf]
    %v133 = vld [vmem:[#allocation3 + $0x34] sm:$0xf]
    %v134 = vld [vmem:[#allocation3 + $0x38] sm:$0xf]
    %v135 = vld [vmem:[#allocation3 + $0x3c] sm:$0xf]
    %v136 = vld [vmem:[#allocation6] sm:$0xf]
    %v137 = vld [vmem:[#allocation6 + $0x4] sm:$0xf]
    %v138 = vld [vmem:[#allocation6 + $0x8] sm:$0xf]
    %v139 = vld [vmem:[#allocation6 + $0xc] sm:$0xf]
    %v140 = vld [vmem:[#allocation6 + $0x10] sm:$0xf]
    %v141 = vld [vmem:[#allocation6 + $0x14] sm:$0xf]
    %v142 = vld [vmem:[#allocation6 + $0x18] sm:$0xf]
    %v143 = vld [vmem:[#allocation6 + $0x1c] sm:$0xf]
    %v144 = vld [vmem:[#allocation6 + $0x20] sm:$0xf]
    %v145 = vld [vmem:[#allocation6 + $0x24] sm:$0xf]
    %v146 = vld [vmem:[#allocation6 + $0x28] sm:$0xf]
    %v147 = vld [vmem:[#allocation6 + $0x2c] sm:$0xf]
    %v148 = vld [vmem:[#allocation6 + $0x30] sm:$0xf]
    %v149 = vld [vmem:[#allocation6 + $0x34] sm:$0xf]
    %v150 = vld [vmem:[#allocation6 + $0x38] sm:$0xf]
    %v151 = vld [vmem:[#allocation6 + $0x3c] sm:$0xf]
    %v168 = vunpack.c.l.b16 %v120
    %v169 = vunpack.c.l.b16 %v121
    %v170 = vunpack.c.l.b16 %v122
    %v171 = vunpack.c.l.b16 %v123
    %v172 = vunpack.c.l.b16 %v124
    %v173 = vunpack.c.l.b16 %v125
    %v174 = vunpack.c.l.b16 %v126
    %v175 = vunpack.c.l.b16 %v127
    %v176 = vunpack.c.l.b16 %v128
    %v177 = vunpack.c.l.b16 %v129
    %v178 = vunpack.c.l.b16 %v130
    %v179 = vunpack.c.l.b16 %v131
    %v180 = vunpack.c.l.b16 %v132
    %v181 = vunpack.c.l.b16 %v133
    %v182 = vunpack.c.l.b16 %v134
    %v183 = vunpack.c.l.b16 %v135
    %v184 = vpack.c.b16 %v169, %v168
    %v185 = vpack.c.b16 %v171, %v170
    %v186 = vpack.c.b16 %v173, %v172
    %v187 = vpack.c.b16 %v175, %v174
    %v188 = vpack.c.b16 %v177, %v176
    %v189 = vpack.c.b16 %v179, %v178
    %v190 = vpack.c.b16 %v181, %v180
    %v191 = vpack.c.b16 %v183, %v182
    %v216 = vunpack.c.l.b16 %v136
    %v217 = vunpack.c.l.b16 %v137
    %v218 = vunpack.c.l.b16 %v138
    %v219 = vunpack.c.l.b16 %v139
    %v220 = vunpack.c.l.b16 %v140
    %v221 = vunpack.c.l.b16 %v141
    %v222 = vunpack.c.l.b16 %v142
    %v223 = vunpack.c.l.b16 %v143
    %v224 = vunpack.c.l.b16 %v144
    %v225 = vunpack.c.l.b16 %v145
    %v226 = vunpack.c.l.b16 %v146
    %v227 = vunpack.c.l.b16 %v147
    %v228 = vunpack.c.l.b16 %v148
    %v229 = vunpack.c.l.b16 %v149
    %v230 = vunpack.c.l.b16 %v150
    %v231 = vunpack.c.l.b16 %v151
    %v232 = vpack.c.b16 %v217, %v216
    %v233 = vpack.c.b16 %v219, %v218
    %v234 = vpack.c.b16 %v221, %v220
    %v235 = vpack.c.b16 %v223, %v222
    %v236 = vpack.c.b16 %v225, %v224
    %v237 = vpack.c.b16 %v227, %v226
    %v238 = vpack.c.b16 %v229, %v228
    %v239 = vpack.c.b16 %v231, %v230
    %248 = vmatprep.subr.bf16.mxu0 0
    %249 = vmatpush1.bf16.msra.mxu0 %v232
    %250 = vmatprep.subr.bf16.mxu0 0
    %251 = vmatpush1.bf16.msra.mxu0 %v233
    %252 = vmatprep.subr.bf16.mxu0 0
    %253 = vmatpush1.bf16.msra.mxu0 %v234
    %254 = vmatprep.subr.bf16.mxu0 0
    %255 = vmatpush1.bf16.msra.mxu0 %v235
    %256 = vmatprep.subr.bf16.mxu0 0
    %257 = vmatpush1.bf16.msra.mxu0 %v236
    %258 = vmatprep.subr.bf16.mxu0 0
    %259 = vmatpush1.bf16.msra.mxu0 %v237
    %260 = vmatprep.subr.bf16.mxu0 0
    %261 = vmatpush1.bf16.msra.mxu0 %v238
    %262 = vmatprep.subr.bf16.mxu0 0
    %263 = vmatpush1.bf16.msra.mxu0 %v239
    %264 = vmatprep.subr.bf16.mxu0 0
    %265 = vmatpush1.bf16.msra.mxu0 0
    %266 = vmatprep.subr.bf16.mxu0 0
    %267 = vmatpush1.bf16.msra.mxu0 0
    %268 = vmatprep.subr.bf16.mxu0 0
    %269 = vmatpush1.bf16.msra.mxu0 0
    %270 = vmatprep.subr.bf16.mxu0 0
    %271 = vmatpush1.bf16.msra.mxu0 0
    %272 = vmatprep.subr.bf16.mxu0 0
    %273 = vmatpush1.bf16.msra.mxu0 0
    %274 = vmatprep.subr.bf16.mxu0 0
    %275 = vmatpush1.bf16.msra.mxu0 0
    %276 = vmatprep.subr.bf16.mxu0 0
    %277 = vmatpush1.bf16.msra.mxu0 0
    %278 = vmatprep.subr.bf16.mxu0 0
    %279 = vmatpush1.bf16.msra.mxu0 0
    %280 = vmatprep.mubr.bf16.mxu0 0
    %281 = vmatmul.mubr.bf16.gmra.mrb[0].mxu0 %v184
    %v282 = vpop.f32.mrb[0].mxu0
    %v283 = vadd.f32 0.0, %v282
    %v284 = vpop.f32.mrb[0].mxu0
    %v285 = vpop.f32.mrb[0].mxu0
    %v286 = vadd.f32 0.0, %v285
    %v287 = vpop.f32.mrb[0].mxu0
    %288 = vmatprep.mubr.bf16.mxu0 0
    %289 = vmatmul.mubr.bf16.gmra.mrb[0].mxu0 %v185
    %v290 = vpop.f32.mrb[0].mxu0
    %v291 = vadd.f32 0.0, %v290
    %v292 = vpop.f32.mrb[0].mxu0
    %v293 = vpop.f32.mrb[0].mxu0
    %v294 = vadd.f32 0.0, %v293
    %v295 = vpop.f32.mrb[0].mxu0
    %296 = vmatprep.mubr.bf16.mxu0 0
    %297 = vmatmul.mubr.bf16.gmra.mrb[0].mxu0 %v186
    %v298 = vpop.f32.mrb[0].mxu0
    %v299 = vadd.f32 0.0, %v298
    %v300 = vpop.f32.mrb[0].mxu0
    %v301 = vpop.f32.mrb[0].mxu0
    %v302 = vadd.f32 0.0, %v301
    %v303 = vpop.f32.mrb[0].mxu0
    %304 = vmatprep.mubr.bf16.mxu0 0
    %305 = vmatmul.mubr.bf16.gmra.mrb[0].mxu0 %v187
    %v306 = vpop.f32.mrb[0].mxu0
    %v307 = vadd.f32 0.0, %v306
    %v308 = vpop.f32.mrb[0].mxu0
    %v309 = vpop.f32.mrb[0].mxu0
    %v310 = vadd.f32 0.0, %v309
    %v311 = vpop.f32.mrb[0].mxu0
    %312 = vmatprep.mubr.bf16.mxu0 0
    %313 = vmatmul.mubr.bf16.gmra.mrb[0].mxu0 %v188
    %v314 = vpop.f32.mrb[0].mxu0
    %v315 = vadd.f32 0.0, %v314
    %v316 = vpop.f32.mrb[0].mxu0
    %v317 = vpop.f32.mrb[0].mxu0
    %v318 = vadd.f32 0.0, %v317
    %v319 = vpop.f32.mrb[0].mxu0
    %320 = vmatprep.mubr.bf16.mxu0 0
    %321 = vmatmul.mubr.bf16.gmra.mrb[0].mxu0 %v189
    %v322 = vpop.f32.mrb[0].mxu0
    %v323 = vadd.f32 0.0, %v322
    %v324 = vpop.f32.mrb[0].mxu0
    %v325 = vpop.f32.mrb[0].mxu0
    %v326 = vadd.f32 0.0, %v325
    %v327 = vpop.f32.mrb[0].mxu0
    %328 = vmatprep.mubr.bf16.mxu0 0
    %329 = vmatmul.mubr.bf16.gmra.mrb[0].mxu0 %v190
    %v330 = vpop.f32.mrb[0].mxu0
    %v331 = vadd.f32 0.0, %v330
    %v332 = vpop.f32.mrb[0].mxu0
    %v333 = vpop.f32.mrb[0].mxu0
    %v334 = vadd.f32 0.0, %v333
    %v335 = vpop.f32.mrb[0].mxu0
    %336 = vmatprep.mubr.bf16.mxu0 0
    %337 = vmatmul.mubr.bf16.gmra.mrb[0].mxu0 %v191
    %v338 = vpop.f32.mrb[0].mxu0
    %v339 = vadd.f32 0.0, %v338
    %v340 = vpop.f32.mrb[0].mxu0
    %v341 = vpop.f32.mrb[0].mxu0
    %v342 = vadd.f32 0.0, %v341
    %v343 = vpop.f32.mrb[0].mxu0
    %344 = vdwg.mxu0
    %v345 = vadd.f32 %v104, %v283
    %v346 = vadd.f32 %v105, %v286
    %v347 = vadd.f32 %v106, %v291
    %v348 = vadd.f32 %v107, %v294
    %v349 = vadd.f32 %v108, %v299
    %v350 = vadd.f32 %v109, %v302
    %v351 = vadd.f32 %v110, %v307
    %v352 = vadd.f32 %v111, %v310
    %v353 = vadd.f32 %v112, %v315
    %v354 = vadd.f32 %v113, %v318
    %v355 = vadd.f32 %v114, %v323
    %v356 = vadd.f32 %v115, %v326
    %v357 = vadd.f32 %v116, %v331
    %v358 = vadd.f32 %v117, %v334
    %v359 = vadd.f32 %v118, %v339
    %v360 = vadd.f32 %v119, %v342
    %361 = vst [vmem:[#allocation2] sm:$0xff] %v345
    %362 = vst [vmem:[#allocation2 + $0x8] sm:$0xff] %v346
    %363 = vst [vmem:[#allocation2 + $0x10] sm:$0xff] %v347
    %364 = vst [vmem:[#allocation2 + $0x18] sm:$0xff] %v348
    %365 = vst [vmem:[#allocation2 + $0x20] sm:$0xff] %v349
    %366 = vst [vmem:[#allocation2 + $0x28] sm:$0xff] %v350
    %367 = vst [vmem:[#allocation2 + $0x30] sm:$0xff] %v351
    %368 = vst [vmem:[#allocation2 + $0x38] sm:$0xff] %v352
    %369 = vst [vmem:[#allocation2 + $0x40] sm:$0xff] %v353
    %370 = vst [vmem:[#allocation2 + $0x48] sm:$0xff] %v354
    %371 = vst [vmem:[#allocation2 + $0x50] sm:$0xff] %v355
    %372 = vst [vmem:[#allocation2 + $0x58] sm:$0xff] %v356
    %373 = vst [vmem:[#allocation2 + $0x60] sm:$0xff] %v357
    %374 = vst [vmem:[#allocation2 + $0x68] sm:$0xff] %v358
    %375 = vst [vmem:[#allocation2 + $0x70] sm:$0xff] %v359
    %376 = vst [vmem:[#allocation2 + $0x78] sm:$0xff] %v360
    // Predicated region
    $region46: #{tpu_custom_call.1} parent=1 // pred_check
      %p377 = pneg %p84
    $region47: #{tpu_custom_call.1} parent=1 // pred_check_branch
      %379 = sbr.rel (%p377) target = $region49
    $region48: #{tpu_custom_call.1} parent=1 // pred_region
      %v380 = vld [vmem:[#allocation2] sm:$0xff]
      %v381 = vld [vmem:[#allocation2 + $0x8] sm:$0xff]
      %v382 = vld [vmem:[#allocation2 + $0x10] sm:$0xff]
      %v383 = vld [vmem:[#allocation2 + $0x18] sm:$0xff]
      %v384 = vld [vmem:[#allocation2 + $0x20] sm:$0xff]
      %v385 = vld [vmem:[#allocation2 + $0x28] sm:$0xff]
      %v386 = vld [vmem:[#allocation2 + $0x30] sm:$0xff]
      %v387 = vld [vmem:[#allocation2 + $0x38] sm:$0xff]
      %v388 = vld [vmem:[#allocation2 + $0x40] sm:$0xff]
      %v389 = vld [vmem:[#allocation2 + $0x48] sm:$0xff]
      %v390 = vld [vmem:[#allocation2 + $0x50] sm:$0xff]
      %v391 = vld [vmem:[#allocation2 + $0x58] sm:$0xff]
      %v392 = vld [vmem:[#allocation2 + $0x60] sm:$0xff]
      %v393 = vld [vmem:[#allocation2 + $0x68] sm:$0xff]
      %v394 = vld [vmem:[#allocation2 + $0x70] sm:$0xff]
      %v395 = vld [vmem:[#allocation2 + $0x78] sm:$0xff]
      %v396 = vld [vmem:[#allocation8] sm:$0x1]
      %v398 = vlaneseq
      %v399 = vshrl.u32 %v398, 7
      %v400 = vsub.s32 0, %v399
      %v401 = vrot.slane %v396, %v400
      %v403 = vadd.f32 %v380, %v401
      %v404 = vadd.f32 %v381, %v401
      %v405 = vadd.f32 %v382, %v401
      %v406 = vadd.f32 %v383, %v401
      %v407 = vadd.f32 %v384, %v401
      %v408 = vadd.f32 %v385, %v401
      %v409 = vadd.f32 %v386, %v401
      %v410 = vadd.f32 %v387, %v401
      %v411 = vadd.f32 %v388, %v401
      %v412 = vadd.f32 %v389, %v401
      %v413 = vadd.f32 %v390, %v401
      %v414 = vadd.f32 %v391, %v401
      %v415 = vadd.f32 %v392, %v401
      %v416 = vadd.f32 %v393, %v401
      %v417 = vadd.f32 %v394, %v401
      %v418 = vadd.f32 %v395, %v401
      %v419 = vmul.f32 %v403, 0.5
      %v420 = vmul.f32 %v404, 0.5
      %v421 = vmul.f32 %v405, 0.5
      %v422 = vmul.f32 %v406, 0.5
      %v423 = vmul.f32 %v407, 0.5
      %v424 = vmul.f32 %v408, 0.5
      %v425 = vmul.f32 %v409, 0.5
      %v426 = vmul.f32 %v410, 0.5
      %v427 = vmul.f32 %v411, 0.5
      %v428 = vmul.f32 %v412, 0.5
      %v429 = vmul.f32 %v413, 0.5
      %v430 = vmul.f32 %v414, 0.5
      %v431 = vmul.f32 %v415, 0.5
      %v432 = vmul.f32 %v416, 0.5
      %v433 = vmul.f32 %v417, 0.5
      %v434 = vmul.f32 %v418, 0.5
      %v435 = vmul.f32 %v403, 0.70710677
      %v436 = vmul.f32 %v404, 0.70710677
      %v437 = vmul.f32 %v405, 0.70710677
      %v438 = vmul.f32 %v406, 0.70710677
      %v439 = vmul.f32 %v407, 0.70710677
      %v440 = vmul.f32 %v408, 0.70710677
      %v441 = vmul.f32 %v409, 0.70710677
      %v442 = vmul.f32 %v410, 0.70710677
      %v443 = vmul.f32 %v411, 0.70710677
      %v444 = vmul.f32 %v412, 0.70710677
      %v445 = vmul.f32 %v413, 0.70710677
      %v446 = vmul.f32 %v414, 0.70710677
      %v447 = vmul.f32 %v415, 0.70710677
      %v448 = vmul.f32 %v416, 0.70710677
      %v449 = vmul.f32 %v417, 0.70710677
      %v450 = vmul.f32 %v418, 0.70710677
      %v451 = verf.f32.pop %v435
      %v452 = verf.f32.pop %v436
      %v453 = verf.f32.pop %v437
      %v454 = verf.f32.pop %v438
      %v455 = verf.f32.pop %v439
      %v456 = verf.f32.pop %v440
      %v457 = verf.f32.pop %v441
      %v458 = verf.f32.pop %v442
      %v459 = verf.f32.pop %v443
      %v460 = verf.f32.pop %v444
      %v461 = verf.f32.pop %v445
      %v462 = verf.f32.pop %v446
      %v463 = verf.f32.pop %v447
      %v464 = verf.f32.pop %v448
      %v465 = verf.f32.pop %v449
      %v466 = verf.f32.pop %v450
      %v467 = vadd.f32 %v451, 1.0
      %v468 = vadd.f32 %v452, 1.0
      %v469 = vadd.f32 %v453, 1.0
      %v470 = vadd.f32 %v454, 1.0
      %v471 = vadd.f32 %v455, 1.0
      %v472 = vadd.f32 %v456, 1.0
      %v473 = vadd.f32 %v457, 1.0
      %v474 = vadd.f32 %v458, 1.0
      %v475 = vadd.f32 %v459, 1.0
      %v476 = vadd.f32 %v460, 1.0
      %v477 = vadd.f32 %v461, 1.0
      %v478 = vadd.f32 %v462, 1.0
      %v479 = vadd.f32 %v463, 1.0
      %v480 = vadd.f32 %v464, 1.0
      %v481 = vadd.f32 %v465, 1.0
      %v482 = vadd.f32 %v466, 1.0
      %v483 = vmul.f32 %v419, %v467
      %v484 = vmul.f32 %v420, %v468
      %v485 = vmul.f32 %v421, %v469
      %v486 = vmul.f32 %v422, %v470
      %v487 = vmul.f32 %v423, %v471
      %v488 = vmul.f32 %v424, %v472
      %v489 = vmul.f32 %v425, %v473
      %v490 = vmul.f32 %v426, %v474
      %v491 = vmul.f32 %v427, %v475
      %v492 = vmul.f32 %v428, %v476
      %v493 = vmul.f32 %v429, %v477
      %v494 = vmul.f32 %v430, %v478
      %v495 = vmul.f32 %v431, %v479
      %v496 = vmul.f32 %v432, %v480
      %v497 = vmul.f32 %v433, %v481
      %v498 = vmul.f32 %v434, %v482
      %v499 = vld [vmem:[#allocation9] sm:$0x1]
      %v501 = vlaneseq
      %v502 = vshrl.u32 %v501, 7
      %v503 = vsub.s32 0, %v502
      %v504 = vrot.slane %v499, %v503
      %v506 = vmul.f32 %v483, %v504
      %v507 = vmul.f32 %v484, %v504
      %v508 = vmul.f32 %v485, %v504
      %v509 = vmul.f32 %v486, %v504
      %v510 = vmul.f32 %v487, %v504
      %v511 = vmul.f32 %v488, %v504
      %v512 = vmul.f32 %v489, %v504
      %v513 = vmul.f32 %v490, %v504
      %v514 = vmul.f32 %v491, %v504
      %v515 = vmul.f32 %v492, %v504
      %v516 = vmul.f32 %v493, %v504
      %v517 = vmul.f32 %v494, %v504
      %v518 = vmul.f32 %v495, %v504
      %v519 = vmul.f32 %v496, %v504
      %v520 = vmul.f32 %v497, %v504
      %v521 = vmul.f32 %v498, %v504
      %v522 = vld [vmem:[#allocation11] sm:$0x1]
      %v524 = vlaneseq
      %v525 = vshrl.u32 %v524, 7
      %v526 = vsub.s32 0, %v525
      %v527 = vrot.slane %v522, %v526
      %v529 = vadd.f32 %v506, %v527
      %v530 = vadd.f32 %v507, %v527
      %v531 = vadd.f32 %v508, %v527
      %v532 = vadd.f32 %v509, %v527
      %v533 = vadd.f32 %v510, %v527
      %v534 = vadd.f32 %v511, %v527
      %v535 = vadd.f32 %v512, %v527
      %v536 = vadd.f32 %v513, %v527
      %v537 = vadd.f32 %v514, %v527
      %v538 = vadd.f32 %v515, %v527
      %v539 = vadd.f32 %v516, %v527
      %v540 = vadd.f32 %v517, %v527
      %v541 = vadd.f32 %v518, %v527
      %v542 = vadd.f32 %v519, %v527
      %v543 = vadd.f32 %v520, %v527
      %v544 = vadd.f32 %v521, %v527
      %v545 = vpack.c.bf16 %v530, %v529
      %v546 = vpack.c.bf16 %v532, %v531
      %v547 = vpack.c.bf16 %v534, %v533
      %v548 = vpack.c.bf16 %v536, %v535
      %v549 = vpack.c.bf16 %v538, %v537
      %v550 = vpack.c.bf16 %v540, %v539
      %v551 = vpack.c.bf16 %v542, %v541
      %v552 = vpack.c.bf16 %v544, %v543
      %v561 = vunpack.c.l.b16 %v545
      %v562 = vunpack.c.h.b16 %v545
      %v563 = vunpack.c.l.b16 %v546
      %v564 = vunpack.c.h.b16 %v546
      %v565 = vunpack.c.l.b16 %v547
      %v566 = vunpack.c.h.b16 %v547
      %v567 = vunpack.c.l.b16 %v548
      %v568 = vunpack.c.h.b16 %v548
      %v569 = vunpack.c.l.b16 %v549
      %v570 = vunpack.c.h.b16 %v549
      %v571 = vunpack.c.l.b16 %v550
      %v572 = vunpack.c.h.b16 %v550
      %v573 = vunpack.c.l.b16 %v551
      %v574 = vunpack.c.h.b16 %v551
      %v575 = vunpack.c.l.b16 %v552
      %v576 = vunpack.c.h.b16 %v552
      %v577 = vpack.c.b16 %v561, %v561
      %v578 = vpack.c.b16 %v562, %v562
      %v579 = vpack.c.b16 %v563, %v563
      %v580 = vpack.c.b16 %v564, %v564
      %v581 = vpack.c.b16 %v565, %v565
      %v582 = vpack.c.b16 %v566, %v566
      %v583 = vpack.c.b16 %v567, %v567
      %v584 = vpack.c.b16 %v568, %v568
      %v585 = vpack.c.b16 %v569, %v569
      %v586 = vpack.c.b16 %v570, %v570
      %v587 = vpack.c.b16 %v571, %v571
      %v588 = vpack.c.b16 %v572, %v572
      %v589 = vpack.c.b16 %v573, %v573
      %v590 = vpack.c.b16 %v574, %v574
      %v591 = vpack.c.b16 %v575, %v575
      %v592 = vpack.c.b16 %v576, %v576
      %609 = vst [vmem:[#allocation12] sm:$0xf] %v577
      %610 = vst [vmem:[#allocation12 + $0x4] sm:$0xf] %v578
      %611 = vst [vmem:[#allocation12 + $0x8] sm:$0xf] %v579
      %612 = vst [vmem:[#allocation12 + $0xc] sm:$0xf] %v580
      %613 = vst [vmem:[#allocation12 + $0x10] sm:$0xf] %v581
      %614 = vst [vmem:[#allocation12 + $0x14] sm:$0xf] %v582
      %615 = vst [vmem:[#allocation12 + $0x18] sm:$0xf] %v583
      %616 = vst [vmem:[#allocation12 + $0x1c] sm:$0xf] %v584
      %617 = vst [vmem:[#allocation12 + $0x20] sm:$0xf] %v585
      %618 = vst [vmem:[#allocation12 + $0x24] sm:$0xf] %v586
      %619 = vst [vmem:[#allocation12 + $0x28] sm:$0xf] %v587
      %620 = vst [vmem:[#allocation12 + $0x2c] sm:$0xf] %v588
      %621 = vst [vmem:[#allocation12 + $0x30] sm:$0xf] %v589
      %622 = vst [vmem:[#allocation12 + $0x34] sm:$0xf] %v590
      %623 = vst [vmem:[#allocation12 + $0x38] sm:$0xf] %v591
      %624 = vst [vmem:[#allocation12 + $0x3c] sm:$0xf] %v592
    $region49: #{tpu_custom_call.1} parent=1 // pred_fallthru
      _
    // Predicated region
    $region50: #{tpu_custom_call.1} parent=1 // pred_check
      _
    $region51: #{tpu_custom_call.1} parent=1 // pred_check_branch
      %626 = sbr.rel (0) target = $region53
    $region52: #{tpu_custom_call.1} parent=1 // pred_region
      %s628 = ssub.s32 1024, 1024
      %629 = vsyncadd [#allocation5], %s628
      %s630 = sshll.u32 [#allocation12], 4
      %s631 = int_to_ptr.vmem [resolvable:$true] %s630
      %636 = dma.vmem_to_hbm [thread:$0]  %s631, 1024, %s5, [#allocation5], 64, 64, 4
    $region53: #{tpu_custom_call.1} parent=1 // pred_fallthru
      _
    // Predicated region
    $region54: #{tpu_custom_call.1} parent=1 // pred_check
      _
    $region55: #{tpu_custom_call.1} parent=1 // pred_check_branch
      %638 = sbr.rel (0) target = $region57
    $region56: #{tpu_custom_call.1} parent=1 // pred_region
      %639 = dma.done [#allocation5], 1024
    $region57: #{tpu_custom_call.1} parent=1 // pred_fallthru
      _
    %640 = vsyncpa [#allocation4], 1
    %641 = vsyncpa [#allocation7], 1
    %642 = vsyncpa [#allocation10], 1
    %643 = vsyncpa [#allocation5], 1

</llo_original>
